<compile_context>
chip_gen: v6e
topology: v6e:2x2x1
jax: 0.10.0
libtpu: 0.0.40
codegen_flags: <defaults>
</compile_context>

<pallas_src>
import functools
import math

import jax
import jax.numpy as jnp
from jax.experimental import pallas as pl
from jax.experimental.pallas import tpu as pltpu


def _round_up(x, m):
    return ((x + m - 1) // m) * m


def _embedding_dma_gather_kernel(ids_ref, w_hbm, out_ref, sem,
                                 *, tokens_per_block, dma_depth):
    # ids_ref: SMEM (n_blocks * tokens_per_block,) int32  (scalar prefetch)
    # w_hbm:   HBM  (V, D) embedding table (never copied wholesale to VMEM)
    # out_ref: VMEM (tokens_per_block, D) output tile for this grid step
    # sem:     DMA semaphores, shape (dma_depth,)
    base = pl.program_id(0) * tokens_per_block

    def start_row(t):                      # issue HBM row -> out tile row DMA
        idx = ids_ref[base + t]            # dynamic scalar row index (SMEM)
        pltpu.make_async_copy(
            w_hbm.at[pl.ds(idx, 1), :],    # (1, D) row in HBM
            out_ref.at[pl.ds(t, 1), :],    # (1, D) row of the VMEM out tile
            sem.at[t % dma_depth],
        ).start()

    def wait_row(t):                       # same-size descriptor for the wait
        pltpu.make_async_copy(
            w_hbm.at[pl.ds(0, 1), :],
            out_ref.at[pl.ds(t, 1), :],
            sem.at[t % dma_depth],
        ).wait()

    # Prime the window, then keep `dma_depth` row DMAs in flight.
    for t in range(dma_depth):
        start_row(t)
    for t in range(tokens_per_block):
        if t + dma_depth < tokens_per_block:   # static condition (unrolled)
            start_row(t + dma_depth)
        wait_row(t)
    # All row DMAs have completed here; the pipeline writes the tile to HBM.


def weight_parallel_embedding_forward(ids, weight, *,
                                      tokens_per_block=256, dma_depth=8):
    """Equivalent of WeightParallelEmbedding.forward (padding_idx/max_norm None)."""
    B, S = ids.shape
    V, D = weight.shape
    n_tokens = B * S

    # Token tile: multiple of 8 (fp32 sublane tiling), but never bigger than
    # the (rounded-up) token count so tiny inputs don't pay for a huge tile.
    tpb = max(8, min(_round_up(tokens_per_block, 8), _round_up(n_tokens, 8)))
    depth = min(dma_depth, tpb)
    n_blocks = pl.cdiv(n_tokens, tpb)

    # Pad only the (tiny) id array so in-kernel scalar reads stay in bounds;
    # padded tokens gather row 0 and their output rows are dropped by the
    # pipeline's partial-block write masking (no post-kernel slice needed).
    flat_ids = ids.reshape(n_tokens).astype(jnp.int32)
    pad = n_blocks * tpb - n_tokens
    if pad:
        flat_ids = jnp.concatenate([flat_ids, jnp.zeros((pad,), jnp.int32)])
    # TODO(synk): for very large B*S, chunk the id prefetch instead of putting
    # the whole flat id array in SMEM.

    tile_bytes = tpb * D * jnp.dtype(weight.dtype).itemsize
    vmem_limit = min(48 * 1024 * 1024,
                     max(32 * 1024 * 1024, 2 * tile_bytes + (4 << 20)))

    out = pl.pallas_call(
        functools.partial(_embedding_dma_gather_kernel,
                          tokens_per_block=tpb, dma_depth=depth),
        out_shape=jax.ShapeDtypeStruct((n_tokens, D), weight.dtype),
        grid_spec=pltpu.PrefetchScalarGridSpec(
            num_scalar_prefetch=1,                        # flat_ids -> SMEM
            grid=(n_blocks,),
            in_specs=[
                pl.BlockSpec(memory_space=pl.ANY),        # table stays in HBM
            ],
            out_specs=pl.BlockSpec((tpb, D), lambda i, ids_sm: (i, 0)),
            scratch_shapes=[pltpu.SemaphoreType.DMA((depth,))],
        ),
        compiler_params=pltpu.CompilerParams(
            dimension_semantics=("parallel",),            # v7x: 2 TCs
            vmem_limit_bytes=vmem_limit,
        ),
    )(flat_ids, weight)

    return out.reshape(B, S, D)


def init_weight_parallel_embedding(key, num_embeddings, embedding_dim, world_size):
    """Deterministic synthetic init mirroring the module's construction:
    one xavier_normal_ partition table per rank, concatenated along dim=-1."""
    assert embedding_dim % world_size == 0, "world_size must divide embedding_dim"
    dpp = embedding_dim // world_size
    # torch.nn.init.xavier_normal_ on a (num_embeddings, dpp) weight:
    std = math.sqrt(2.0 / (num_embeddings + dpp))
    keys = jax.random.split(key, world_size)
    parts = [std * jax.random.normal(k, (num_embeddings, dpp), jnp.float32)
             for k in keys]
    return jnp.concatenate(parts, axis=1)          # (V, embedding_dim)


if __name__ == "__main__":
    num_embeddings = 512    # vocabulary size
    embedding_dim = 256     # full hidden size (multiple of 128 -> lane-dense)
    world_size = 4          # -> 64 dims per partition
    B, S = 2, 8             # small batch / sequence

    key = jax.random.PRNGKey(0)
    k_w, k_ids = jax.random.split(key)

    weight = init_weight_parallel_embedding(k_w, num_embeddings,
                                            embedding_dim, world_size)
    ids = jax.random.randint(k_ids, (B, S), 0, num_embeddings, dtype=jnp.int32)

    out = weight_parallel_embedding_forward(ids, weight)
    out = jax.block_until_ready(out)

    # Reference check against plain JAX gather (same semantics as the module).
    ref = weight[ids]
    assert out.shape == (B, S, embedding_dim)
    assert jnp.allclose(out, ref), "Pallas embedding gather mismatch"

    # TODO(synk): max_norm / padding_idx / scale_grad_by_freq paths are unused
    # with the module's defaults (None/False) and are not implemented here.
    print("KERNEL_OK")
</pallas_src>

<mosaic_0001>
module attributes {stable_mosaic.version = 11 : i64} {
  func.func @_embedding_dma_gather_kernel(%arg0: i32, %arg1: memref<16xi32, #tpu.memory_space<smem>>, %arg2: memref<512x256xf32, #tpu.memory_space<any>>, %arg3: memref<16x256xf32, #tpu.memory_space<vmem>>, %arg4: memref<8x!tpu.dma_semaphore, #tpu.memory_space<semaphore_mem>>) attributes {dimension_semantics = [#tpu.dimension_semantics<parallel>], iteration_bounds = array<i64: 1>, scalar_prefetch = 1 : i64, scratch_operands = 1 : i64, tpu.core_type = #tpu.core_type<tc>, window_params = [{}, {transform_indices = @transform_1, window_bounds = array<i64: 16, 256>}]} {
    %c16_i32 = arith.constant 16 : i32
    %0 = arith.muli %arg0, %c16_i32 : i32
    %c0_i32 = arith.constant 0 : i32
    %1 = arith.addi %0, %c0_i32 : i32
    %2 = arith.index_cast %1 : i32 to index
    %3 = memref.load %arg1[%2] : memref<16xi32, #tpu.memory_space<smem>>
    %c0_i32_0 = arith.constant 0 : i32
    %c0_i32_1 = arith.constant 0 : i32
    %4 = tpu.memref_slice %arg2[%3, %c0_i32_1] : memref<512x256xf32, #tpu.memory_space<any>> -> memref<1x256xf32, #tpu.memory_space<any>>
    %c0_i32_2 = arith.constant 0 : i32
    %c0_i32_3 = arith.constant 0 : i32
    %5 = tpu.memref_slice %arg3[%c0_i32_2, %c0_i32_3] : memref<16x256xf32, #tpu.memory_space<vmem>> -> memref<1x256xf32, #tpu.memory_space<vmem>>
    %6 = tpu.memref_slice %arg4[%c0_i32_0] : memref<8x!tpu.dma_semaphore, #tpu.memory_space<semaphore_mem>> -> memref<1x!tpu.dma_semaphore, #tpu.memory_space<semaphore_mem>>
    %7 = tpu.memref_squeeze %6 : memref<1x!tpu.dma_semaphore, #tpu.memory_space<semaphore_mem>> -> memref<!tpu.dma_semaphore, #tpu.memory_space<semaphore_mem>>
    tpu.enqueue_dma source(%4 : memref<1x256xf32, #tpu.memory_space<any>>) target(%5 : memref<1x256xf32, #tpu.memory_space<vmem>>) target_semaphore(%7 : memref<!tpu.dma_semaphore, #tpu.memory_space<semaphore_mem>>)
    %c1_i32 = arith.constant 1 : i32
    %8 = arith.addi %0, %c1_i32 : i32
    %9 = arith.index_cast %8 : i32 to index
    %10 = memref.load %arg1[%9] : memref<16xi32, #tpu.memory_space<smem>>
    %c1_i32_4 = arith.constant 1 : i32
    %c0_i32_5 = arith.constant 0 : i32
    %11 = tpu.memref_slice %arg2[%10, %c0_i32_5] : memref<512x256xf32, #tpu.memory_space<any>> -> memref<1x256xf32, #tpu.memory_space<any>>
    %c1_i32_6 = arith.constant 1 : i32
    %c0_i32_7 = arith.constant 0 : i32
    %12 = tpu.memref_slice %arg3[%c1_i32_6, %c0_i32_7] : memref<16x256xf32, #tpu.memory_space<vmem>> -> memref<1x256xf32, #tpu.memory_space<vmem>>
    %13 = tpu.memref_slice %arg4[%c1_i32_4] : memref<8x!tpu.dma_semaphore, #tpu.memory_space<semaphore_mem>> -> memref<1x!tpu.dma_semaphore, #tpu.memory_space<semaphore_mem>>
    %14 = tpu.memref_squeeze %13 : memref<1x!tpu.dma_semaphore, #tpu.memory_space<semaphore_mem>> -> memref<!tpu.dma_semaphore, #tpu.memory_space<semaphore_mem>>
    tpu.enqueue_dma source(%11 : memref<1x256xf32, #tpu.memory_space<any>>) target(%12 : memref<1x256xf32, #tpu.memory_space<vmem>>) target_semaphore(%14 : memref<!tpu.dma_semaphore, #tpu.memory_space<semaphore_mem>>)
    %c2_i32 = arith.constant 2 : i32
    %15 = arith.addi %0, %c2_i32 : i32
    %16 = arith.index_cast %15 : i32 to index
    %17 = memref.load %arg1[%16] : memref<16xi32, #tpu.memory_space<smem>>
    %c2_i32_8 = arith.constant 2 : i32
    %c0_i32_9 = arith.constant 0 : i32
    %18 = tpu.memref_slice %arg2[%17, %c0_i32_9] : memref<512x256xf32, #tpu.memory_space<any>> -> memref<1x256xf32, #tpu.memory_space<any>>
    %c2_i32_10 = arith.constant 2 : i32
    %c0_i32_11 = arith.constant 0 : i32
    %19 = tpu.memref_slice %arg3[%c2_i32_10, %c0_i32_11] : memref<16x256xf32, #tpu.memory_space<vmem>> -> memref<1x256xf32, #tpu.memory_space<vmem>>
    %20 = tpu.memref_slice %arg4[%c2_i32_8] : memref<8x!tpu.dma_semaphore, #tpu.memory_space<semaphore_mem>> -> memref<1x!tpu.dma_semaphore, #tpu.memory_space<semaphore_mem>>
    %21 = tpu.memref_squeeze %20 : memref<1x!tpu.dma_semaphore, #tpu.memory_space<semaphore_mem>> -> memref<!tpu.dma_semaphore, #tpu.memory_space<semaphore_mem>>
    tpu.enqueue_dma source(%18 : memref<1x256xf32, #tpu.memory_space<any>>) target(%19 : memref<1x256xf32, #tpu.memory_space<vmem>>) target_semaphore(%21 : memref<!tpu.dma_semaphore, #tpu.memory_space<semaphore_mem>>)
    %c3_i32 = arith.constant 3 : i32
    %22 = arith.addi %0, %c3_i32 : i32
    %23 = arith.index_cast %22 : i32 to index
    %24 = memref.load %arg1[%23] : memref<16xi32, #tpu.memory_space<smem>>
    %c3_i32_12 = arith.constant 3 : i32
    %c0_i32_13 = arith.constant 0 : i32
    %25 = tpu.memref_slice %arg2[%24, %c0_i32_13] : memref<512x256xf32, #tpu.memory_space<any>> -> memref<1x256xf32, #tpu.memory_space<any>>
    %c3_i32_14 = arith.constant 3 : i32
    %c0_i32_15 = arith.constant 0 : i32
    %26 = tpu.memref_slice %arg3[%c3_i32_14, %c0_i32_15] : memref<16x256xf32, #tpu.memory_space<vmem>> -> memref<1x256xf32, #tpu.memory_space<vmem>>
    %27 = tpu.memref_slice %arg4[%c3_i32_12] : memref<8x!tpu.dma_semaphore, #tpu.memory_space<semaphore_mem>> -> memref<1x!tpu.dma_semaphore, #tpu.memory_space<semaphore_mem>>
    %28 = tpu.memref_squeeze %27 : memref<1x!tpu.dma_semaphore, #tpu.memory_space<semaphore_mem>> -> memref<!tpu.dma_semaphore, #tpu.memory_space<semaphore_mem>>
    tpu.enqueue_dma source(%25 : memref<1x256xf32, #tpu.memory_space<any>>) target(%26 : memref<1x256xf32, #tpu.memory_space<vmem>>) target_semaphore(%28 : memref<!tpu.dma_semaphore, #tpu.memory_space<semaphore_mem>>)
    %c4_i32 = arith.constant 4 : i32
    %29 = arith.addi %0, %c4_i32 : i32
    %30 = arith.index_cast %29 : i32 to index
    %31 = memref.load %arg1[%30] : memref<16xi32, #tpu.memory_space<smem>>
    %c4_i32_16 = arith.constant 4 : i32
    %c0_i32_17 = arith.constant 0 : i32
    %32 = tpu.memref_slice %arg2[%31, %c0_i32_17] : memref<512x256xf32, #tpu.memory_space<any>> -> memref<1x256xf32, #tpu.memory_space<any>>
    %c4_i32_18 = arith.constant 4 : i32
    %c0_i32_19 = arith.constant 0 : i32
    %33 = tpu.memref_slice %arg3[%c4_i32_18, %c0_i32_19] : memref<16x256xf32, #tpu.memory_space<vmem>> -> memref<1x256xf32, #tpu.memory_space<vmem>>
    %34 = tpu.memref_slice %arg4[%c4_i32_16] : memref<8x!tpu.dma_semaphore, #tpu.memory_space<semaphore_mem>> -> memref<1x!tpu.dma_semaphore, #tpu.memory_space<semaphore_mem>>
    %35 = tpu.memref_squeeze %34 : memref<1x!tpu.dma_semaphore, #tpu.memory_space<semaphore_mem>> -> memref<!tpu.dma_semaphore, #tpu.memory_space<semaphore_mem>>
    tpu.enqueue_dma source(%32 : memref<1x256xf32, #tpu.memory_space<any>>) target(%33 : memref<1x256xf32, #tpu.memory_space<vmem>>) target_semaphore(%35 : memref<!tpu.dma_semaphore, #tpu.memory_space<semaphore_mem>>)
    %c5_i32 = arith.constant 5 : i32
    %36 = arith.addi %0, %c5_i32 : i32
    %37 = arith.index_cast %36 : i32 to index
    %38 = memref.load %arg1[%37] : memref<16xi32, #tpu.memory_space<smem>>
    %c5_i32_20 = arith.constant 5 : i32
    %c0_i32_21 = arith.constant 0 : i32
    %39 = tpu.memref_slice %arg2[%38, %c0_i32_21] : memref<512x256xf32, #tpu.memory_space<any>> -> memref<1x256xf32, #tpu.memory_space<any>>
    %c5_i32_22 = arith.constant 5 : i32
    %c0_i32_23 = arith.constant 0 : i32
    %40 = tpu.memref_slice %arg3[%c5_i32_22, %c0_i32_23] : memref<16x256xf32, #tpu.memory_space<vmem>> -> memref<1x256xf32, #tpu.memory_space<vmem>>
    %41 = tpu.memref_slice %arg4[%c5_i32_20] : memref<8x!tpu.dma_semaphore, #tpu.memory_space<semaphore_mem>> -> memref<1x!tpu.dma_semaphore, #tpu.memory_space<semaphore_mem>>
    %42 = tpu.memref_squeeze %41 : memref<1x!tpu.dma_semaphore, #tpu.memory_space<semaphore_mem>> -> memref<!tpu.dma_semaphore, #tpu.memory_space<semaphore_mem>>
    tpu.enqueue_dma source(%39 : memref<1x256xf32, #tpu.memory_space<any>>) target(%40 : memref<1x256xf32, #tpu.memory_space<vmem>>) target_semaphore(%42 : memref<!tpu.dma_semaphore, #tpu.memory_space<semaphore_mem>>)
    %c6_i32 = arith.constant 6 : i32
    %43 = arith.addi %0, %c6_i32 : i32
    %44 = arith.index_cast %43 : i32 to index
    %45 = memref.load %arg1[%44] : memref<16xi32, #tpu.memory_space<smem>>
    %c6_i32_24 = arith.constant 6 : i32
    %c0_i32_25 = arith.constant 0 : i32
    %46 = tpu.memref_slice %arg2[%45, %c0_i32_25] : memref<512x256xf32, #tpu.memory_space<any>> -> memref<1x256xf32, #tpu.memory_space<any>>
    %c6_i32_26 = arith.constant 6 : i32
    %c0_i32_27 = arith.constant 0 : i32
    %47 = tpu.memref_slice %arg3[%c6_i32_26, %c0_i32_27] : memref<16x256xf32, #tpu.memory_space<vmem>> -> memref<1x256xf32, #tpu.memory_space<vmem>>
    %48 = tpu.memref_slice %arg4[%c6_i32_24] : memref<8x!tpu.dma_semaphore, #tpu.memory_space<semaphore_mem>> -> memref<1x!tpu.dma_semaphore, #tpu.memory_space<semaphore_mem>>
    %49 = tpu.memref_squeeze %48 : memref<1x!tpu.dma_semaphore, #tpu.memory_space<semaphore_mem>> -> memref<!tpu.dma_semaphore, #tpu.memory_space<semaphore_mem>>
    tpu.enqueue_dma source(%46 : memref<1x256xf32, #tpu.memory_space<any>>) target(%47 : memref<1x256xf32, #tpu.memory_space<vmem>>) target_semaphore(%49 : memref<!tpu.dma_semaphore, #tpu.memory_space<semaphore_mem>>)
    %c7_i32 = arith.constant 7 : i32
    %50 = arith.addi %0, %c7_i32 : i32
    %51 = arith.index_cast %50 : i32 to index
    %52 = memref.load %arg1[%51] : memref<16xi32, #tpu.memory_space<smem>>
    %c7_i32_28 = arith.constant 7 : i32
    %c0_i32_29 = arith.constant 0 : i32
    %53 = tpu.memref_slice %arg2[%52, %c0_i32_29] : memref<512x256xf32, #tpu.memory_space<any>> -> memref<1x256xf32, #tpu.memory_space<any>>
    %c7_i32_30 = arith.constant 7 : i32
    %c0_i32_31 = arith.constant 0 : i32
    %54 = tpu.memref_slice %arg3[%c7_i32_30, %c0_i32_31] : memref<16x256xf32, #tpu.memory_space<vmem>> -> memref<1x256xf32, #tpu.memory_space<vmem>>
    %55 = tpu.memref_slice %arg4[%c7_i32_28] : memref<8x!tpu.dma_semaphore, #tpu.memory_space<semaphore_mem>> -> memref<1x!tpu.dma_semaphore, #tpu.memory_space<semaphore_mem>>
    %56 = tpu.memref_squeeze %55 : memref<1x!tpu.dma_semaphore, #tpu.memory_space<semaphore_mem>> -> memref<!tpu.dma_semaphore, #tpu.memory_space<semaphore_mem>>
    tpu.enqueue_dma source(%53 : memref<1x256xf32, #tpu.memory_space<any>>) target(%54 : memref<1x256xf32, #tpu.memory_space<vmem>>) target_semaphore(%56 : memref<!tpu.dma_semaphore, #tpu.memory_space<semaphore_mem>>)
    %c8_i32 = arith.constant 8 : i32
    %57 = arith.addi %0, %c8_i32 : i32
    %58 = arith.index_cast %57 : i32 to index
    %59 = memref.load %arg1[%58] : memref<16xi32, #tpu.memory_space<smem>>
    %c0_i32_32 = arith.constant 0 : i32
    %c0_i32_33 = arith.constant 0 : i32
    %60 = tpu.memref_slice %arg2[%59, %c0_i32_33] : memref<512x256xf32, #tpu.memory_space<any>> -> memref<1x256xf32, #tpu.memory_space<any>>
    %c8_i32_34 = arith.constant 8 : i32
    %c0_i32_35 = arith.constant 0 : i32
    %61 = tpu.memref_slice %arg3[%c8_i32_34, %c0_i32_35] : memref<16x256xf32, #tpu.memory_space<vmem>> -> memref<1x256xf32, #tpu.memory_space<vmem>>
    %62 = tpu.memref_slice %arg4[%c0_i32_32] : memref<8x!tpu.dma_semaphore, #tpu.memory_space<semaphore_mem>> -> memref<1x!tpu.dma_semaphore, #tpu.memory_space<semaphore_mem>>
    %63 = tpu.memref_squeeze %62 : memref<1x!tpu.dma_semaphore, #tpu.memory_space<semaphore_mem>> -> memref<!tpu.dma_semaphore, #tpu.memory_space<semaphore_mem>>
    tpu.enqueue_dma source(%60 : memref<1x256xf32, #tpu.memory_space<any>>) target(%61 : memref<1x256xf32, #tpu.memory_space<vmem>>) target_semaphore(%63 : memref<!tpu.dma_semaphore, #tpu.memory_space<semaphore_mem>>)
    %c0_i32_36 = arith.constant 0 : i32
    %c0_i32_37 = arith.constant 0 : i32
    %c0_i32_38 = arith.constant 0 : i32
    %64 = tpu.memref_slice %arg2[%c0_i32_37, %c0_i32_38] : memref<512x256xf32, #tpu.memory_space<any>> -> memref<1x256xf32, #tpu.memory_space<any>>
    %c0_i32_39 = arith.constant 0 : i32
    %c0_i32_40 = arith.constant 0 : i32
    %65 = tpu.memref_slice %arg3[%c0_i32_39, %c0_i32_40] : memref<16x256xf32, #tpu.memory_space<vmem>> -> memref<1x256xf32, #tpu.memory_space<vmem>>
    %66 = tpu.memref_slice %arg4[%c0_i32_36] : memref<8x!tpu.dma_semaphore, #tpu.memory_space<semaphore_mem>> -> memref<1x!tpu.dma_semaphore, #tpu.memory_space<semaphore_mem>>
    %67 = tpu.memref_squeeze %66 : memref<1x!tpu.dma_semaphore, #tpu.memory_space<semaphore_mem>> -> memref<!tpu.dma_semaphore, #tpu.memory_space<semaphore_mem>>
    tpu.wait_dma2 semaphore(%67 : memref<!tpu.dma_semaphore, #tpu.memory_space<semaphore_mem>>) src(%64 : memref<1x256xf32, #tpu.memory_space<any>>) dst(%65 : memref<1x256xf32, #tpu.memory_space<vmem>>)
    %c9_i32 = arith.constant 9 : i32
    %68 = arith.addi %0, %c9_i32 : i32
    %69 = arith.index_cast %68 : i32 to index
    %70 = memref.load %arg1[%69] : memref<16xi32, #tpu.memory_space<smem>>
    %c1_i32_41 = arith.constant 1 : i32
    %c0_i32_42 = arith.constant 0 : i32
    %71 = tpu.memref_slice %arg2[%70, %c0_i32_42] : memref<512x256xf32, #tpu.memory_space<any>> -> memref<1x256xf32, #tpu.memory_space<any>>
    %c9_i32_43 = arith.constant 9 : i32
    %c0_i32_44 = arith.constant 0 : i32
    %72 = tpu.memref_slice %arg3[%c9_i32_43, %c0_i32_44] : memref<16x256xf32, #tpu.memory_space<vmem>> -> memref<1x256xf32, #tpu.memory_space<vmem>>
    %73 = tpu.memref_slice %arg4[%c1_i32_41] : memref<8x!tpu.dma_semaphore, #tpu.memory_space<semaphore_mem>> -> memref<1x!tpu.dma_semaphore, #tpu.memory_space<semaphore_mem>>
    %74 = tpu.memref_squeeze %73 : memref<1x!tpu.dma_semaphore, #tpu.memory_space<semaphore_mem>> -> memref<!tpu.dma_semaphore, #tpu.memory_space<semaphore_mem>>
    tpu.enqueue_dma source(%71 : memref<1x256xf32, #tpu.memory_space<any>>) target(%72 : memref<1x256xf32, #tpu.memory_space<vmem>>) target_semaphore(%74 : memref<!tpu.dma_semaphore, #tpu.memory_space<semaphore_mem>>)
    %c1_i32_45 = arith.constant 1 : i32
    %c0_i32_46 = arith.constant 0 : i32
    %c0_i32_47 = arith.constant 0 : i32
    %75 = tpu.memref_slice %arg2[%c0_i32_46, %c0_i32_47] : memref<512x256xf32, #tpu.memory_space<any>> -> memref<1x256xf32, #tpu.memory_space<any>>
    %c1_i32_48 = arith.constant 1 : i32
    %c0_i32_49 = arith.constant 0 : i32
    %76 = tpu.memref_slice %arg3[%c1_i32_48, %c0_i32_49] : memref<16x256xf32, #tpu.memory_space<vmem>> -> memref<1x256xf32, #tpu.memory_space<vmem>>
    %77 = tpu.memref_slice %arg4[%c1_i32_45] : memref<8x!tpu.dma_semaphore, #tpu.memory_space<semaphore_mem>> -> memref<1x!tpu.dma_semaphore, #tpu.memory_space<semaphore_mem>>
    %78 = tpu.memref_squeeze %77 : memref<1x!tpu.dma_semaphore, #tpu.memory_space<semaphore_mem>> -> memref<!tpu.dma_semaphore, #tpu.memory_space<semaphore_mem>>
    tpu.wait_dma2 semaphore(%78 : memref<!tpu.dma_semaphore, #tpu.memory_space<semaphore_mem>>) src(%75 : memref<1x256xf32, #tpu.memory_space<any>>) dst(%76 : memref<1x256xf32, #tpu.memory_space<vmem>>)
    %c10_i32 = arith.constant 10 : i32
    %79 = arith.addi %0, %c10_i32 : i32
    %80 = arith.index_cast %79 : i32 to index
    %81 = memref.load %arg1[%80] : memref<16xi32, #tpu.memory_space<smem>>
    %c2_i32_50 = arith.constant 2 : i32
    %c0_i32_51 = arith.constant 0 : i32
    %82 = tpu.memref_slice %arg2[%81, %c0_i32_51] : memref<512x256xf32, #tpu.memory_space<any>> -> memref<1x256xf32, #tpu.memory_space<any>>
    %c10_i32_52 = arith.constant 10 : i32
    %c0_i32_53 = arith.constant 0 : i32
    %83 = tpu.memref_slice %arg3[%c10_i32_52, %c0_i32_53] : memref<16x256xf32, #tpu.memory_space<vmem>> -> memref<1x256xf32, #tpu.memory_space<vmem>>
    %84 = tpu.memref_slice %arg4[%c2_i32_50] : memref<8x!tpu.dma_semaphore, #tpu.memory_space<semaphore_mem>> -> memref<1x!tpu.dma_semaphore, #tpu.memory_space<semaphore_mem>>
    %85 = tpu.memref_squeeze %84 : memref<1x!tpu.dma_semaphore, #tpu.memory_space<semaphore_mem>> -> memref<!tpu.dma_semaphore, #tpu.memory_space<semaphore_mem>>
    tpu.enqueue_dma source(%82 : memref<1x256xf32, #tpu.memory_space<any>>) target(%83 : memref<1x256xf32, #tpu.memory_space<vmem>>) target_semaphore(%85 : memref<!tpu.dma_semaphore, #tpu.memory_space<semaphore_mem>>)
    %c2_i32_54 = arith.constant 2 : i32
    %c0_i32_55 = arith.constant 0 : i32
    %c0_i32_56 = arith.constant 0 : i32
    %86 = tpu.memref_slice %arg2[%c0_i32_55, %c0_i32_56] : memref<512x256xf32, #tpu.memory_space<any>> -> memref<1x256xf32, #tpu.memory_space<any>>
    %c2_i32_57 = arith.constant 2 : i32
    %c0_i32_58 = arith.constant 0 : i32
    %87 = tpu.memref_slice %arg3[%c2_i32_57, %c0_i32_58] : memref<16x256xf32, #tpu.memory_space<vmem>> -> memref<1x256xf32, #tpu.memory_space<vmem>>
    %88 = tpu.memref_slice %arg4[%c2_i32_54] : memref<8x!tpu.dma_semaphore, #tpu.memory_space<semaphore_mem>> -> memref<1x!tpu.dma_semaphore, #tpu.memory_space<semaphore_mem>>
    %89 = tpu.memref_squeeze %88 : memref<1x!tpu.dma_semaphore, #tpu.memory_space<semaphore_mem>> -> memref<!tpu.dma_semaphore, #tpu.memory_space<semaphore_mem>>
    tpu.wait_dma2 semaphore(%89 : memref<!tpu.dma_semaphore, #tpu.memory_space<semaphore_mem>>) src(%86 : memref<1x256xf32, #tpu.memory_space<any>>) dst(%87 : memref<1x256xf32, #tpu.memory_space<vmem>>)
    %c11_i32 = arith.constant 11 : i32
    %90 = arith.addi %0, %c11_i32 : i32
    %91 = arith.index_cast %90 : i32 to index
    %92 = memref.load %arg1[%91] : memref<16xi32, #tpu.memory_space<smem>>
    %c3_i32_59 = arith.constant 3 : i32
    %c0_i32_60 = arith.constant 0 : i32
    %93 = tpu.memref_slice %arg2[%92, %c0_i32_60] : memref<512x256xf32, #tpu.memory_space<any>> -> memref<1x256xf32, #tpu.memory_space<any>>
    %c11_i32_61 = arith.constant 11 : i32
    %c0_i32_62 = arith.constant 0 : i32
    %94 = tpu.memref_slice %arg3[%c11_i32_61, %c0_i32_62] : memref<16x256xf32, #tpu.memory_space<vmem>> -> memref<1x256xf32, #tpu.memory_space<vmem>>
    %95 = tpu.memref_slice %arg4[%c3_i32_59] : memref<8x!tpu.dma_semaphore, #tpu.memory_space<semaphore_mem>> -> memref<1x!tpu.dma_semaphore, #tpu.memory_space<semaphore_mem>>
    %96 = tpu.memref_squeeze %95 : memref<1x!tpu.dma_semaphore, #tpu.memory_space<semaphore_mem>> -> memref<!tpu.dma_semaphore, #tpu.memory_space<semaphore_mem>>
    tpu.enqueue_dma source(%93 : memref<1x256xf32, #tpu.memory_space<any>>) target(%94 : memref<1x256xf32, #tpu.memory_space<vmem>>) target_semaphore(%96 : memref<!tpu.dma_semaphore, #tpu.memory_space<semaphore_mem>>)
    %c3_i32_63 = arith.constant 3 : i32
    %c0_i32_64 = arith.constant 0 : i32
    %c0_i32_65 = arith.constant 0 : i32
    %97 = tpu.memref_slice %arg2[%c0_i32_64, %c0_i32_65] : memref<512x256xf32, #tpu.memory_space<any>> -> memref<1x256xf32, #tpu.memory_space<any>>
    %c3_i32_66 = arith.constant 3 : i32
    %c0_i32_67 = arith.constant 0 : i32
    %98 = tpu.memref_slice %arg3[%c3_i32_66, %c0_i32_67] : memref<16x256xf32, #tpu.memory_space<vmem>> -> memref<1x256xf32, #tpu.memory_space<vmem>>
    %99 = tpu.memref_slice %arg4[%c3_i32_63] : memref<8x!tpu.dma_semaphore, #tpu.memory_space<semaphore_mem>> -> memref<1x!tpu.dma_semaphore, #tpu.memory_space<semaphore_mem>>
    %100 = tpu.memref_squeeze %99 : memref<1x!tpu.dma_semaphore, #tpu.memory_space<semaphore_mem>> -> memref<!tpu.dma_semaphore, #tpu.memory_space<semaphore_mem>>
    tpu.wait_dma2 semaphore(%100 : memref<!tpu.dma_semaphore, #tpu.memory_space<semaphore_mem>>) src(%97 : memref<1x256xf32, #tpu.memory_space<any>>) dst(%98 : memref<1x256xf32, #tpu.memory_space<vmem>>)
    %c12_i32 = arith.constant 12 : i32
    %101 = arith.addi %0, %c12_i32 : i32
    %102 = arith.index_cast %101 : i32 to index
    %103 = memref.load %arg1[%102] : memref<16xi32, #tpu.memory_space<smem>>
    %c4_i32_68 = arith.constant 4 : i32
    %c0_i32_69 = arith.constant 0 : i32
    %104 = tpu.memref_slice %arg2[%103, %c0_i32_69] : memref<512x256xf32, #tpu.memory_space<any>> -> memref<1x256xf32, #tpu.memory_space<any>>
    %c12_i32_70 = arith.constant 12 : i32
    %c0_i32_71 = arith.constant 0 : i32
    %105 = tpu.memref_slice %arg3[%c12_i32_70, %c0_i32_71] : memref<16x256xf32, #tpu.memory_space<vmem>> -> memref<1x256xf32, #tpu.memory_space<vmem>>
    %106 = tpu.memref_slice %arg4[%c4_i32_68] : memref<8x!tpu.dma_semaphore, #tpu.memory_space<semaphore_mem>> -> memref<1x!tpu.dma_semaphore, #tpu.memory_space<semaphore_mem>>
    %107 = tpu.memref_squeeze %106 : memref<1x!tpu.dma_semaphore, #tpu.memory_space<semaphore_mem>> -> memref<!tpu.dma_semaphore, #tpu.memory_space<semaphore_mem>>
    tpu.enqueue_dma source(%104 : memref<1x256xf32, #tpu.memory_space<any>>) target(%105 : memref<1x256xf32, #tpu.memory_space<vmem>>) target_semaphore(%107 : memref<!tpu.dma_semaphore, #tpu.memory_space<semaphore_mem>>)
    %c4_i32_72 = arith.constant 4 : i32
    %c0_i32_73 = arith.constant 0 : i32
    %c0_i32_74 = arith.constant 0 : i32
    %108 = tpu.memref_slice %arg2[%c0_i32_73, %c0_i32_74] : memref<512x256xf32, #tpu.memory_space<any>> -> memref<1x256xf32, #tpu.memory_space<any>>
    %c4_i32_75 = arith.constant 4 : i32
    %c0_i32_76 = arith.constant 0 : i32
    %109 = tpu.memref_slice %arg3[%c4_i32_75, %c0_i32_76] : memref<16x256xf32, #tpu.memory_space<vmem>> -> memref<1x256xf32, #tpu.memory_space<vmem>>
    %110 = tpu.memref_slice %arg4[%c4_i32_72] : memref<8x!tpu.dma_semaphore, #tpu.memory_space<semaphore_mem>> -> memref<1x!tpu.dma_semaphore, #tpu.memory_space<semaphore_mem>>
    %111 = tpu.memref_squeeze %110 : memref<1x!tpu.dma_semaphore, #tpu.memory_space<semaphore_mem>> -> memref<!tpu.dma_semaphore, #tpu.memory_space<semaphore_mem>>
    tpu.wait_dma2 semaphore(%111 : memref<!tpu.dma_semaphore, #tpu.memory_space<semaphore_mem>>) src(%108 : memref<1x256xf32, #tpu.memory_space<any>>) dst(%109 : memref<1x256xf32, #tpu.memory_space<vmem>>)
    %c13_i32 = arith.constant 13 : i32
    %112 = arith.addi %0, %c13_i32 : i32
    %113 = arith.index_cast %112 : i32 to index
    %114 = memref.load %arg1[%113] : memref<16xi32, #tpu.memory_space<smem>>
    %c5_i32_77 = arith.constant 5 : i32
    %c0_i32_78 = arith.constant 0 : i32
    %115 = tpu.memref_slice %arg2[%114, %c0_i32_78] : memref<512x256xf32, #tpu.memory_space<any>> -> memref<1x256xf32, #tpu.memory_space<any>>
    %c13_i32_79 = arith.constant 13 : i32
    %c0_i32_80 = arith.constant 0 : i32
    %116 = tpu.memref_slice %arg3[%c13_i32_79, %c0_i32_80] : memref<16x256xf32, #tpu.memory_space<vmem>> -> memref<1x256xf32, #tpu.memory_space<vmem>>
    %117 = tpu.memref_slice %arg4[%c5_i32_77] : memref<8x!tpu.dma_semaphore, #tpu.memory_space<semaphore_mem>> -> memref<1x!tpu.dma_semaphore, #tpu.memory_space<semaphore_mem>>
    %118 = tpu.memref_squeeze %117 : memref<1x!tpu.dma_semaphore, #tpu.memory_space<semaphore_mem>> -> memref<!tpu.dma_semaphore, #tpu.memory_space<semaphore_mem>>
    tpu.enqueue_dma source(%115 : memref<1x256xf32, #tpu.memory_space<any>>) target(%116 : memref<1x256xf32, #tpu.memory_space<vmem>>) target_semaphore(%118 : memref<!tpu.dma_semaphore, #tpu.memory_space<semaphore_mem>>)
    %c5_i32_81 = arith.constant 5 : i32
    %c0_i32_82 = arith.constant 0 : i32
    %c0_i32_83 = arith.constant 0 : i32
    %119 = tpu.memref_slice %arg2[%c0_i32_82, %c0_i32_83] : memref<512x256xf32, #tpu.memory_space<any>> -> memref<1x256xf32, #tpu.memory_space<any>>
    %c5_i32_84 = arith.constant 5 : i32
    %c0_i32_85 = arith.constant 0 : i32
    %120 = tpu.memref_slice %arg3[%c5_i32_84, %c0_i32_85] : memref<16x256xf32, #tpu.memory_space<vmem>> -> memref<1x256xf32, #tpu.memory_space<vmem>>
    %121 = tpu.memref_slice %arg4[%c5_i32_81] : memref<8x!tpu.dma_semaphore, #tpu.memory_space<semaphore_mem>> -> memref<1x!tpu.dma_semaphore, #tpu.memory_space<semaphore_mem>>
    %122 = tpu.memref_squeeze %121 : memref<1x!tpu.dma_semaphore, #tpu.memory_space<semaphore_mem>> -> memref<!tpu.dma_semaphore, #tpu.memory_space<semaphore_mem>>
    tpu.wait_dma2 semaphore(%122 : memref<!tpu.dma_semaphore, #tpu.memory_space<semaphore_mem>>) src(%119 : memref<1x256xf32, #tpu.memory_space<any>>) dst(%120 : memref<1x256xf32, #tpu.memory_space<vmem>>)
    %c14_i32 = arith.constant 14 : i32
    %123 = arith.addi %0, %c14_i32 : i32
    %124 = arith.index_cast %123 : i32 to index
    %125 = memref.load %arg1[%124] : memref<16xi32, #tpu.memory_space<smem>>
    %c6_i32_86 = arith.constant 6 : i32
    %c0_i32_87 = arith.constant 0 : i32
    %126 = tpu.memref_slice %arg2[%125, %c0_i32_87] : memref<512x256xf32, #tpu.memory_space<any>> -> memref<1x256xf32, #tpu.memory_space<any>>
    %c14_i32_88 = arith.constant 14 : i32
    %c0_i32_89 = arith.constant 0 : i32
    %127 = tpu.memref_slice %arg3[%c14_i32_88, %c0_i32_89] : memref<16x256xf32, #tpu.memory_space<vmem>> -> memref<1x256xf32, #tpu.memory_space<vmem>>
    %128 = tpu.memref_slice %arg4[%c6_i32_86] : memref<8x!tpu.dma_semaphore, #tpu.memory_space<semaphore_mem>> -> memref<1x!tpu.dma_semaphore, #tpu.memory_space<semaphore_mem>>
    %129 = tpu.memref_squeeze %128 : memref<1x!tpu.dma_semaphore, #tpu.memory_space<semaphore_mem>> -> memref<!tpu.dma_semaphore, #tpu.memory_space<semaphore_mem>>
    tpu.enqueue_dma source(%126 : memref<1x256xf32, #tpu.memory_space<any>>) target(%127 : memref<1x256xf32, #tpu.memory_space<vmem>>) target_semaphore(%129 : memref<!tpu.dma_semaphore, #tpu.memory_space<semaphore_mem>>)
    %c6_i32_90 = arith.constant 6 : i32
    %c0_i32_91 = arith.constant 0 : i32
    %c0_i32_92 = arith.constant 0 : i32
    %130 = tpu.memref_slice %arg2[%c0_i32_91, %c0_i32_92] : memref<512x256xf32, #tpu.memory_space<any>> -> memref<1x256xf32, #tpu.memory_space<any>>
    %c6_i32_93 = arith.constant 6 : i32
    %c0_i32_94 = arith.constant 0 : i32
    %131 = tpu.memref_slice %arg3[%c6_i32_93, %c0_i32_94] : memref<16x256xf32, #tpu.memory_space<vmem>> -> memref<1x256xf32, #tpu.memory_space<vmem>>
    %132 = tpu.memref_slice %arg4[%c6_i32_90] : memref<8x!tpu.dma_semaphore, #tpu.memory_space<semaphore_mem>> -> memref<1x!tpu.dma_semaphore, #tpu.memory_space<semaphore_mem>>
    %133 = tpu.memref_squeeze %132 : memref<1x!tpu.dma_semaphore, #tpu.memory_space<semaphore_mem>> -> memref<!tpu.dma_semaphore, #tpu.memory_space<semaphore_mem>>
    tpu.wait_dma2 semaphore(%133 : memref<!tpu.dma_semaphore, #tpu.memory_space<semaphore_mem>>) src(%130 : memref<1x256xf32, #tpu.memory_space<any>>) dst(%131 : memref<1x256xf32, #tpu.memory_space<vmem>>)
    %c15_i32 = arith.constant 15 : i32
    %134 = arith.addi %0, %c15_i32 : i32
    %135 = arith.index_cast %134 : i32 to index
    %136 = memref.load %arg1[%135] : memref<16xi32, #tpu.memory_space<smem>>
    %c7_i32_95 = arith.constant 7 : i32
    %c0_i32_96 = arith.constant 0 : i32
    %137 = tpu.memref_slice %arg2[%136, %c0_i32_96] : memref<512x256xf32, #tpu.memory_space<any>> -> memref<1x256xf32, #tpu.memory_space<any>>
    %c15_i32_97 = arith.constant 15 : i32
    %c0_i32_98 = arith.constant 0 : i32
    %138 = tpu.memref_slice %arg3[%c15_i32_97, %c0_i32_98] : memref<16x256xf32, #tpu.memory_space<vmem>> -> memref<1x256xf32, #tpu.memory_space<vmem>>
    %139 = tpu.memref_slice %arg4[%c7_i32_95] : memref<8x!tpu.dma_semaphore, #tpu.memory_space<semaphore_mem>> -> memref<1x!tpu.dma_semaphore, #tpu.memory_space<semaphore_mem>>
    %140 = tpu.memref_squeeze %139 : memref<1x!tpu.dma_semaphore, #tpu.memory_space<semaphore_mem>> -> memref<!tpu.dma_semaphore, #tpu.memory_space<semaphore_mem>>
    tpu.enqueue_dma source(%137 : memref<1x256xf32, #tpu.memory_space<any>>) target(%138 : memref<1x256xf32, #tpu.memory_space<vmem>>) target_semaphore(%140 : memref<!tpu.dma_semaphore, #tpu.memory_space<semaphore_mem>>)
    %c7_i32_99 = arith.constant 7 : i32
    %c0_i32_100 = arith.constant 0 : i32
    %c0_i32_101 = arith.constant 0 : i32
    %141 = tpu.memref_slice %arg2[%c0_i32_100, %c0_i32_101] : memref<512x256xf32, #tpu.memory_space<any>> -> memref<1x256xf32, #tpu.memory_space<any>>
    %c7_i32_102 = arith.constant 7 : i32
    %c0_i32_103 = arith.constant 0 : i32
    %142 = tpu.memref_slice %arg3[%c7_i32_102, %c0_i32_103] : memref<16x256xf32, #tpu.memory_space<vmem>> -> memref<1x256xf32, #tpu.memory_space<vmem>>
    %143 = tpu.memref_slice %arg4[%c7_i32_99] : memref<8x!tpu.dma_semaphore, #tpu.memory_space<semaphore_mem>> -> memref<1x!tpu.dma_semaphore, #tpu.memory_space<semaphore_mem>>
    %144 = tpu.memref_squeeze %143 : memref<1x!tpu.dma_semaphore, #tpu.memory_space<semaphore_mem>> -> memref<!tpu.dma_semaphore, #tpu.memory_space<semaphore_mem>>
    tpu.wait_dma2 semaphore(%144 : memref<!tpu.dma_semaphore, #tpu.memory_space<semaphore_mem>>) src(%141 : memref<1x256xf32, #tpu.memory_space<any>>) dst(%142 : memref<1x256xf32, #tpu.memory_space<vmem>>)
    %c0_i32_104 = arith.constant 0 : i32
    %c0_i32_105 = arith.constant 0 : i32
    %c0_i32_106 = arith.constant 0 : i32
    %145 = tpu.memref_slice %arg2[%c0_i32_105, %c0_i32_106] : memref<512x256xf32, #tpu.memory_space<any>> -> memref<1x256xf32, #tpu.memory_space<any>>
    %c8_i32_107 = arith.constant 8 : i32
    %c0_i32_108 = arith.constant 0 : i32
    %146 = tpu.memref_slice %arg3[%c8_i32_107, %c0_i32_108] : memref<16x256xf32, #tpu.memory_space<vmem>> -> memref<1x256xf32, #tpu.memory_space<vmem>>
    %147 = tpu.memref_slice %arg4[%c0_i32_104] : memref<8x!tpu.dma_semaphore, #tpu.memory_space<semaphore_mem>> -> memref<1x!tpu.dma_semaphore, #tpu.memory_space<semaphore_mem>>
    %148 = tpu.memref_squeeze %147 : memref<1x!tpu.dma_semaphore, #tpu.memory_space<semaphore_mem>> -> memref<!tpu.dma_semaphore, #tpu.memory_space<semaphore_mem>>
    tpu.wait_dma2 semaphore(%148 : memref<!tpu.dma_semaphore, #tpu.memory_space<semaphore_mem>>) src(%145 : memref<1x256xf32, #tpu.memory_space<any>>) dst(%146 : memref<1x256xf32, #tpu.memory_space<vmem>>)
    %c1_i32_109 = arith.constant 1 : i32
    %c0_i32_110 = arith.constant 0 : i32
    %c0_i32_111 = arith.constant 0 : i32
    %149 = tpu.memref_slice %arg2[%c0_i32_110, %c0_i32_111] : memref<512x256xf32, #tpu.memory_space<any>> -> memref<1x256xf32, #tpu.memory_space<any>>
    %c9_i32_112 = arith.constant 9 : i32
    %c0_i32_113 = arith.constant 0 : i32
    %150 = tpu.memref_slice %arg3[%c9_i32_112, %c0_i32_113] : memref<16x256xf32, #tpu.memory_space<vmem>> -> memref<1x256xf32, #tpu.memory_space<vmem>>
    %151 = tpu.memref_slice %arg4[%c1_i32_109] : memref<8x!tpu.dma_semaphore, #tpu.memory_space<semaphore_mem>> -> memref<1x!tpu.dma_semaphore, #tpu.memory_space<semaphore_mem>>
    %152 = tpu.memref_squeeze %151 : memref<1x!tpu.dma_semaphore, #tpu.memory_space<semaphore_mem>> -> memref<!tpu.dma_semaphore, #tpu.memory_space<semaphore_mem>>
    tpu.wait_dma2 semaphore(%152 : memref<!tpu.dma_semaphore, #tpu.memory_space<semaphore_mem>>) src(%149 : memref<1x256xf32, #tpu.memory_space<any>>) dst(%150 : memref<1x256xf32, #tpu.memory_space<vmem>>)
    %c2_i32_114 = arith.constant 2 : i32
    %c0_i32_115 = arith.constant 0 : i32
    %c0_i32_116 = arith.constant 0 : i32
    %153 = tpu.memref_slice %arg2[%c0_i32_115, %c0_i32_116] : memref<512x256xf32, #tpu.memory_space<any>> -> memref<1x256xf32, #tpu.memory_space<any>>
    %c10_i32_117 = arith.constant 10 : i32
    %c0_i32_118 = arith.constant 0 : i32
    %154 = tpu.memref_slice %arg3[%c10_i32_117, %c0_i32_118] : memref<16x256xf32, #tpu.memory_space<vmem>> -> memref<1x256xf32, #tpu.memory_space<vmem>>
    %155 = tpu.memref_slice %arg4[%c2_i32_114] : memref<8x!tpu.dma_semaphore, #tpu.memory_space<semaphore_mem>> -> memref<1x!tpu.dma_semaphore, #tpu.memory_space<semaphore_mem>>
    %156 = tpu.memref_squeeze %155 : memref<1x!tpu.dma_semaphore, #tpu.memory_space<semaphore_mem>> -> memref<!tpu.dma_semaphore, #tpu.memory_space<semaphore_mem>>
    tpu.wait_dma2 semaphore(%156 : memref<!tpu.dma_semaphore, #tpu.memory_space<semaphore_mem>>) src(%153 : memref<1x256xf32, #tpu.memory_space<any>>) dst(%154 : memref<1x256xf32, #tpu.memory_space<vmem>>)
    %c3_i32_119 = arith.constant 3 : i32
    %c0_i32_120 = arith.constant 0 : i32
    %c0_i32_121 = arith.constant 0 : i32
    %157 = tpu.memref_slice %arg2[%c0_i32_120, %c0_i32_121] : memref<512x256xf32, #tpu.memory_space<any>> -> memref<1x256xf32, #tpu.memory_space<any>>
    %c11_i32_122 = arith.constant 11 : i32
    %c0_i32_123 = arith.constant 0 : i32
    %158 = tpu.memref_slice %arg3[%c11_i32_122, %c0_i32_123] : memref<16x256xf32, #tpu.memory_space<vmem>> -> memref<1x256xf32, #tpu.memory_space<vmem>>
    %159 = tpu.memref_slice %arg4[%c3_i32_119] : memref<8x!tpu.dma_semaphore, #tpu.memory_space<semaphore_mem>> -> memref<1x!tpu.dma_semaphore, #tpu.memory_space<semaphore_mem>>
    %160 = tpu.memref_squeeze %159 : memref<1x!tpu.dma_semaphore, #tpu.memory_space<semaphore_mem>> -> memref<!tpu.dma_semaphore, #tpu.memory_space<semaphore_mem>>
    tpu.wait_dma2 semaphore(%160 : memref<!tpu.dma_semaphore, #tpu.memory_space<semaphore_mem>>) src(%157 : memref<1x256xf32, #tpu.memory_space<any>>) dst(%158 : memref<1x256xf32, #tpu.memory_space<vmem>>)
    %c4_i32_124 = arith.constant 4 : i32
    %c0_i32_125 = arith.constant 0 : i32
    %c0_i32_126 = arith.constant 0 : i32
    %161 = tpu.memref_slice %arg2[%c0_i32_125, %c0_i32_126] : memref<512x256xf32, #tpu.memory_space<any>> -> memref<1x256xf32, #tpu.memory_space<any>>
    %c12_i32_127 = arith.constant 12 : i32
    %c0_i32_128 = arith.constant 0 : i32
    %162 = tpu.memref_slice %arg3[%c12_i32_127, %c0_i32_128] : memref<16x256xf32, #tpu.memory_space<vmem>> -> memref<1x256xf32, #tpu.memory_space<vmem>>
    %163 = tpu.memref_slice %arg4[%c4_i32_124] : memref<8x!tpu.dma_semaphore, #tpu.memory_space<semaphore_mem>> -> memref<1x!tpu.dma_semaphore, #tpu.memory_space<semaphore_mem>>
    %164 = tpu.memref_squeeze %163 : memref<1x!tpu.dma_semaphore, #tpu.memory_space<semaphore_mem>> -> memref<!tpu.dma_semaphore, #tpu.memory_space<semaphore_mem>>
    tpu.wait_dma2 semaphore(%164 : memref<!tpu.dma_semaphore, #tpu.memory_space<semaphore_mem>>) src(%161 : memref<1x256xf32, #tpu.memory_space<any>>) dst(%162 : memref<1x256xf32, #tpu.memory_space<vmem>>)
    %c5_i32_129 = arith.constant 5 : i32
    %c0_i32_130 = arith.constant 0 : i32
    %c0_i32_131 = arith.constant 0 : i32
    %165 = tpu.memref_slice %arg2[%c0_i32_130, %c0_i32_131] : memref<512x256xf32, #tpu.memory_space<any>> -> memref<1x256xf32, #tpu.memory_space<any>>
    %c13_i32_132 = arith.constant 13 : i32
    %c0_i32_133 = arith.constant 0 : i32
    %166 = tpu.memref_slice %arg3[%c13_i32_132, %c0_i32_133] : memref<16x256xf32, #tpu.memory_space<vmem>> -> memref<1x256xf32, #tpu.memory_space<vmem>>
    %167 = tpu.memref_slice %arg4[%c5_i32_129] : memref<8x!tpu.dma_semaphore, #tpu.memory_space<semaphore_mem>> -> memref<1x!tpu.dma_semaphore, #tpu.memory_space<semaphore_mem>>
    %168 = tpu.memref_squeeze %167 : memref<1x!tpu.dma_semaphore, #tpu.memory_space<semaphore_mem>> -> memref<!tpu.dma_semaphore, #tpu.memory_space<semaphore_mem>>
    tpu.wait_dma2 semaphore(%168 : memref<!tpu.dma_semaphore, #tpu.memory_space<semaphore_mem>>) src(%165 : memref<1x256xf32, #tpu.memory_space<any>>) dst(%166 : memref<1x256xf32, #tpu.memory_space<vmem>>)
    %c6_i32_134 = arith.constant 6 : i32
    %c0_i32_135 = arith.constant 0 : i32
    %c0_i32_136 = arith.constant 0 : i32
    %169 = tpu.memref_slice %arg2[%c0_i32_135, %c0_i32_136] : memref<512x256xf32, #tpu.memory_space<any>> -> memref<1x256xf32, #tpu.memory_space<any>>
    %c14_i32_137 = arith.constant 14 : i32
    %c0_i32_138 = arith.constant 0 : i32
    %170 = tpu.memref_slice %arg3[%c14_i32_137, %c0_i32_138] : memref<16x256xf32, #tpu.memory_space<vmem>> -> memref<1x256xf32, #tpu.memory_space<vmem>>
    %171 = tpu.memref_slice %arg4[%c6_i32_134] : memref<8x!tpu.dma_semaphore, #tpu.memory_space<semaphore_mem>> -> memref<1x!tpu.dma_semaphore, #tpu.memory_space<semaphore_mem>>
    %172 = tpu.memref_squeeze %171 : memref<1x!tpu.dma_semaphore, #tpu.memory_space<semaphore_mem>> -> memref<!tpu.dma_semaphore, #tpu.memory_space<semaphore_mem>>
    tpu.wait_dma2 semaphore(%172 : memref<!tpu.dma_semaphore, #tpu.memory_space<semaphore_mem>>) src(%169 : memref<1x256xf32, #tpu.memory_space<any>>) dst(%170 : memref<1x256xf32, #tpu.memory_space<vmem>>)
    %c7_i32_139 = arith.constant 7 : i32
    %c0_i32_140 = arith.constant 0 : i32
    %c0_i32_141 = arith.constant 0 : i32
    %173 = tpu.memref_slice %arg2[%c0_i32_140, %c0_i32_141] : memref<512x256xf32, #tpu.memory_space<any>> -> memref<1x256xf32, #tpu.memory_space<any>>
    %c15_i32_142 = arith.constant 15 : i32
    %c0_i32_143 = arith.constant 0 : i32
    %174 = tpu.memref_slice %arg3[%c15_i32_142, %c0_i32_143] : memref<16x256xf32, #tpu.memory_space<vmem>> -> memref<1x256xf32, #tpu.memory_space<vmem>>
    %175 = tpu.memref_slice %arg4[%c7_i32_139] : memref<8x!tpu.dma_semaphore, #tpu.memory_space<semaphore_mem>> -> memref<1x!tpu.dma_semaphore, #tpu.memory_space<semaphore_mem>>
    %176 = tpu.memref_squeeze %175 : memref<1x!tpu.dma_semaphore, #tpu.memory_space<semaphore_mem>> -> memref<!tpu.dma_semaphore, #tpu.memory_space<semaphore_mem>>
    tpu.wait_dma2 semaphore(%176 : memref<!tpu.dma_semaphore, #tpu.memory_space<semaphore_mem>>) src(%173 : memref<1x256xf32, #tpu.memory_space<any>>) dst(%174 : memref<1x256xf32, #tpu.memory_space<vmem>>)
    return
  }
  func.func @transform_1(%arg0: i32, %arg1: memref<16xi32, #tpu.memory_space<smem>>) -> (i32, i32) {
    %c0_i32 = arith.constant 0 : i32
    %c0_i32_0 = arith.constant 0 : i32
    return %arg0, %c0_i32 : i32, i32
  }
}

</mosaic_0001>

<llo_original>
// kernel: tpu_custom_call.1
$region0: #{tpu_custom_call.1}
  #allocation0 [shape = 'u32[]', space=smem, size = 0x4, offset = 0x4, fixed_abs, tag = 'smem constant byte address 0x4 - core index']
  #allocation1 [shape = 'u32[144,128]{1,0:T(1,128)}', space=vmem, size = 0x12000, scoped, tag = 'internal scratch']
  #allocation2 [shape = 's32[8]{0}', space=sflag, size = 0x20, scoped, tag = 'scratch operand']
  #allocation3 [shape = 's32[1]{0}', space=sflag, size = 0x4, scoped, tag = 'scoped memory for tpu_custom_call.1']
  #allocation4 [shape = 'u8[512]{0}', space=smem, size = 0x200, scoped, tag = 'prefetched SMEM operand 0']
  #allocation7 [shape = 's32[]', space=sflag, size = 0x4, offset = 0, fixed_abs, tag = 'sflag constant byte address 0x0 - dummy sync flag']
  #allocation8 [shape = 's32[]', space=sflag, size = 0x4, offset = 0, fixed_abs, tag = 'sflag constant byte address 0x0 - dummy sync flag']
  #allocation9 [shape = 's32[]', space=sflag, size = 0x4, offset = 0, fixed_abs, tag = 'sflag constant byte address 0x0 - dummy sync flag']
  #allocation10 [shape = 's32[]', space=sflag, size = 0x4, offset = 0, fixed_abs, tag = 'sflag constant byte address 0x0 - dummy sync flag']
  #allocation11 [shape = 's32[]', space=sflag, size = 0x4, offset = 0, fixed_abs, tag = 'sflag constant byte address 0x0 - dummy sync flag']
  #allocation12 [shape = 's32[]', space=sflag, size = 0x4, offset = 0, fixed_abs, tag = 'sflag constant byte address 0x0 - dummy sync flag']
  #allocation13 [shape = 's32[]', space=sflag, size = 0x4, offset = 0, fixed_abs, tag = 'sflag constant byte address 0x0 - dummy sync flag']
  #allocation14 [shape = 's32[]', space=sflag, size = 0x4, offset = 0, fixed_abs, tag = 'sflag constant byte address 0x0 - dummy sync flag']
  #allocation15 [shape = 's32[]', space=sflag, size = 0x4, offset = 0, fixed_abs, tag = 'sflag constant byte address 0x0 - dummy sync flag']
  #allocation16 [shape = 's32[]', space=sflag, size = 0x4, offset = 0, fixed_abs, tag = 'sflag constant byte address 0x0 - dummy sync flag']
  #allocation17 [shape = 's32[]', space=sflag, size = 0x4, offset = 0, fixed_abs, tag = 'sflag constant byte address 0x0 - dummy sync flag']
  #allocation18 [shape = 's32[]', space=sflag, size = 0x4, offset = 0, fixed_abs, tag = 'sflag constant byte address 0x0 - dummy sync flag']
  #allocation19 [shape = 's32[]', space=sflag, size = 0x4, offset = 0, fixed_abs, tag = 'sflag constant byte address 0x0 - dummy sync flag']
  #allocation20 [shape = 's32[]', space=sflag, size = 0x4, offset = 0, fixed_abs, tag = 'sflag constant byte address 0x0 - dummy sync flag']
  #allocation21 [shape = 's32[]', space=sflag, size = 0x4, offset = 0, fixed_abs, tag = 'sflag constant byte address 0x0 - dummy sync flag']
  #allocation22 [shape = 's32[]', space=sflag, size = 0x4, offset = 0, fixed_abs, tag = 'sflag constant byte address 0x0 - dummy sync flag']
  %s0 = inlined_call_operand.hbm [shape: s32[16], index: 0, kind: input, shape index: {}]
  %s1 = inlined_call_operand.hbm [shape: f32[512,256], index: 1, kind: input, shape index: {}]
  %s2 = inlined_call_operand.hbm [shape: f32[16,256], index: 2, kind: output, shape index: {}]
  %s3 = sld [smem:[#allocation0]]
  $region10: #{tpu_custom_call.1} parent=0
    _
  %s5 = ssub.s32 1, %s3
  %s6 = scalar_select 0, %s5, %s3
  %8 = dma.hbm_to_smem %s0, 16, [#allocation4], [#allocation3]
  %9 = dma.done [#allocation3], 16
  %10 = sfence
  $region1: #{tpu_custom_call.1} parent=0
    #allocation5 [shape = 'u8[16384]{0}', space=vmem, size = 0x4000, scoped, tag = 'output window, operand 0, single buffered']
    #allocation6 [shape = 's32[1]{0}', space=sflag, size = 0x4, scoped, tag = 'scoped memory for tpu_custom_call.1']
    %11 = vsyncpa [#allocation6], 0
    %s12 = smul.u32 0, 16
    %s13 = sld [smem:[#allocation4 + %s12]]
    %s14 = sshrl.u32 %s13, 3
    %s15 = sand.u32 %s13, 7
    %s16 = smul.u32 %s14, 16
    %s17 = sadd.s32 %s15, %s16
    %s18 = smul.addr %s17, 16
    %s19 = scalar_lea.hbm %s1, %s18
    %s21 = sshll.u32 [#allocation5], 4
    %s22 = int_to_ptr.vmem [resolvable:$true] %s21
    %24 = dma.hbm_to_vmem [thread:$0]  %s19, 32, %s22, [#allocation2], 128, 128, 1
    %s25 = sadd.s32 %s12, 1
    %s26 = sld [smem:[#allocation4 + %s25]]
    %s27 = sshrl.u32 %s26, 3
    %s28 = sand.u32 %s26, 7
    %s29 = smul.u32 %s27, 16
    %s30 = sadd.s32 %s28, %s29
    %s31 = smul.addr %s30, 16
    %s32 = scalar_lea.hbm %s1, %s31
    %s33 = scalar_lea.vmem [#allocation5], 1
    %s34 = scalar_lea.sflag [#allocation2], 1
    %s36 = sshll.u32 %s33, 4
    %s37 = int_to_ptr.vmem [resolvable:$true] %s36
    %39 = dma.hbm_to_vmem [thread:$0]  %s32, 32, %s37, %s34, 128, 128, 1
    %s40 = sadd.s32 %s12, 2
    %s41 = sld [smem:[#allocation4 + %s40]]
    %s42 = sshrl.u32 %s41, 3
    %s43 = sand.u32 %s41, 7
    %s44 = smul.u32 %s42, 16
    %s45 = sadd.s32 %s43, %s44
    %s46 = smul.addr %s45, 16
    %s47 = scalar_lea.hbm %s1, %s46
    %s48 = scalar_lea.vmem [#allocation5], 2
    %s49 = scalar_lea.sflag [#allocation2], 2
    %s51 = sshll.u32 %s48, 4
    %s52 = int_to_ptr.vmem [resolvable:$true] %s51
    %54 = dma.hbm_to_vmem [thread:$0]  %s47, 32, %s52, %s49, 128, 128, 1
    %s55 = sadd.s32 %s12, 3
    %s56 = sld [smem:[#allocation4 + %s55]]
    %s57 = sshrl.u32 %s56, 3
    %s58 = sand.u32 %s56, 7
    %s59 = smul.u32 %s57, 16
    %s60 = sadd.s32 %s58, %s59
    %s61 = smul.addr %s60, 16
    %s62 = scalar_lea.hbm %s1, %s61
    %s63 = scalar_lea.vmem [#allocation5], 3
    %s64 = scalar_lea.sflag [#allocation2], 3
    %s66 = sshll.u32 %s63, 4
    %s67 = int_to_ptr.vmem [resolvable:$true] %s66
    %69 = dma.hbm_to_vmem [thread:$0]  %s62, 32, %s67, %s64, 128, 128, 1
    %s70 = sadd.s32 %s12, 4
    %s71 = sld [smem:[#allocation4 + %s70]]
    %s72 = sshrl.u32 %s71, 3
    %s73 = sand.u32 %s71, 7
    %s74 = smul.u32 %s72, 16
    %s75 = sadd.s32 %s73, %s74
    %s76 = smul.addr %s75, 16
    %s77 = scalar_lea.hbm %s1, %s76
    %s78 = scalar_lea.vmem [#allocation5], 4
    %s79 = scalar_lea.sflag [#allocation2], 4
    %s81 = sshll.u32 %s78, 4
    %s82 = int_to_ptr.vmem [resolvable:$true] %s81
    %84 = dma.hbm_to_vmem [thread:$0]  %s77, 32, %s82, %s79, 128, 128, 1
    %s85 = sadd.s32 %s12, 5
    %s86 = sld [smem:[#allocation4 + %s85]]
    %s87 = sshrl.u32 %s86, 3
    %s88 = sand.u32 %s86, 7
    %s89 = smul.u32 %s87, 16
    %s90 = sadd.s32 %s88, %s89
    %s91 = smul.addr %s90, 16
    %s92 = scalar_lea.hbm %s1, %s91
    %s93 = scalar_lea.vmem [#allocation5], 5
    %s94 = scalar_lea.sflag [#allocation2], 5
    %s96 = sshll.u32 %s93, 4
    %s97 = int_to_ptr.vmem [resolvable:$true] %s96
    %99 = dma.hbm_to_vmem [thread:$0]  %s92, 32, %s97, %s94, 128, 128, 1
    %s100 = sadd.s32 %s12, 6
    %s101 = sld [smem:[#allocation4 + %s100]]
    %s102 = sshrl.u32 %s101, 3
    %s103 = sand.u32 %s101, 7
    %s104 = smul.u32 %s102, 16
    %s105 = sadd.s32 %s103, %s104
    %s106 = smul.addr %s105, 16
    %s107 = scalar_lea.hbm %s1, %s106
    %s108 = scalar_lea.vmem [#allocation5], 6
    %s109 = scalar_lea.sflag [#allocation2], 6
    %s111 = sshll.u32 %s108, 4
    %s112 = int_to_ptr.vmem [resolvable:$true] %s111
    %114 = dma.hbm_to_vmem [thread:$0]  %s107, 32, %s112, %s109, 128, 128, 1
    %s115 = sadd.s32 %s12, 7
    %s116 = sld [smem:[#allocation4 + %s115]]
    %s117 = sshrl.u32 %s116, 3
    %s118 = sand.u32 %s116, 7
    %s119 = smul.u32 %s117, 16
    %s120 = sadd.s32 %s118, %s119
    %s121 = smul.addr %s120, 16
    %s122 = scalar_lea.hbm %s1, %s121
    %s123 = scalar_lea.vmem [#allocation5], 7
    %s124 = scalar_lea.sflag [#allocation2], 7
    %s126 = sshll.u32 %s123, 4
    %s127 = int_to_ptr.vmem [resolvable:$true] %s126
    %129 = dma.hbm_to_vmem [thread:$0]  %s122, 32, %s127, %s124, 128, 128, 1
    %s130 = sadd.s32 %s12, 8
    %s131 = sld [smem:[#allocation4 + %s130]]
    %s132 = sshrl.u32 %s131, 3
    %s133 = sand.u32 %s131, 7
    %s134 = smul.u32 %s132, 16
    %s135 = sadd.s32 %s133, %s134
    %s136 = smul.addr %s135, 16
    %s137 = scalar_lea.hbm %s1, %s136
    %s138 = scalar_lea.vmem [#allocation5], 16
    %s140 = sshll.u32 %s138, 4
    %s141 = int_to_ptr.vmem [resolvable:$true] %s140
    %143 = dma.hbm_to_vmem [thread:$0]  %s137, 32, %s141, [#allocation2], 128, 128, 1
    %s144 = smul.u32 1, 2
    %s145 = sshll.u32 %s144, 4
    %146 = dma.done [#allocation2], %s145
    %s147 = sadd.s32 %s12, 9
    %s148 = sld [smem:[#allocation4 + %s147]]
    %s149 = sshrl.u32 %s148, 3
    %s150 = sand.u32 %s148, 7
    %s151 = smul.u32 %s149, 16
    %s152 = sadd.s32 %s150, %s151
    %s153 = smul.addr %s152, 16
    %s154 = scalar_lea.hbm %s1, %s153
    %s155 = scalar_lea.vmem [#allocation5], 17
    %s157 = sshll.u32 %s155, 4
    %s158 = int_to_ptr.vmem [resolvable:$true] %s157
    %160 = dma.hbm_to_vmem [thread:$0]  %s154, 32, %s158, %s34, 128, 128, 1
    %s161 = sshll.u32 %s144, 4
    %162 = dma.done %s34, %s161
    %s163 = sadd.s32 %s12, 10
    %s164 = sld [smem:[#allocation4 + %s163]]
    %s165 = sshrl.u32 %s164, 3
    %s166 = sand.u32 %s164, 7
    %s167 = smul.u32 %s165, 16
    %s168 = sadd.s32 %s166, %s167
    %s169 = smul.addr %s168, 16
    %s170 = scalar_lea.hbm %s1, %s169
    %s171 = scalar_lea.vmem [#allocation5], 18
    %s173 = sshll.u32 %s171, 4
    %s174 = int_to_ptr.vmem [resolvable:$true] %s173
    %176 = dma.hbm_to_vmem [thread:$0]  %s170, 32, %s174, %s49, 128, 128, 1
    %s177 = sshll.u32 %s144, 4
    %178 = dma.done %s49, %s177
    %s179 = sadd.s32 %s12, 11
    %s180 = sld [smem:[#allocation4 + %s179]]
    %s181 = sshrl.u32 %s180, 3
    %s182 = sand.u32 %s180, 7
    %s183 = smul.u32 %s181, 16
    %s184 = sadd.s32 %s182, %s183
    %s185 = smul.addr %s184, 16
    %s186 = scalar_lea.hbm %s1, %s185
    %s187 = scalar_lea.vmem [#allocation5], 19
    %s189 = sshll.u32 %s187, 4
    %s190 = int_to_ptr.vmem [resolvable:$true] %s189
    %192 = dma.hbm_to_vmem [thread:$0]  %s186, 32, %s190, %s64, 128, 128, 1
    %s193 = sshll.u32 %s144, 4
    %194 = dma.done %s64, %s193
    %s195 = sadd.s32 %s12, 12
    %s196 = sld [smem:[#allocation4 + %s195]]
    %s197 = sshrl.u32 %s196, 3
    %s198 = sand.u32 %s196, 7
    %s199 = smul.u32 %s197, 16
    %s200 = sadd.s32 %s198, %s199
    %s201 = smul.addr %s200, 16
    %s202 = scalar_lea.hbm %s1, %s201
    %s203 = scalar_lea.vmem [#allocation5], 20
    %s205 = sshll.u32 %s203, 4
    %s206 = int_to_ptr.vmem [resolvable:$true] %s205
    %208 = dma.hbm_to_vmem [thread:$0]  %s202, 32, %s206, %s79, 128, 128, 1
    %s209 = sshll.u32 %s144, 4
    %210 = dma.done %s79, %s209
    %s211 = sadd.s32 %s12, 13
    %s212 = sld [smem:[#allocation4 + %s211]]
    %s213 = sshrl.u32 %s212, 3
    %s214 = sand.u32 %s212, 7
    %s215 = smul.u32 %s213, 16
    %s216 = sadd.s32 %s214, %s215
    %s217 = smul.addr %s216, 16
    %s218 = scalar_lea.hbm %s1, %s217
    %s219 = scalar_lea.vmem [#allocation5], 21
    %s221 = sshll.u32 %s219, 4
    %s222 = int_to_ptr.vmem [resolvable:$true] %s221
    %224 = dma.hbm_to_vmem [thread:$0]  %s218, 32, %s222, %s94, 128, 128, 1
    %s225 = sshll.u32 %s144, 4
    %226 = dma.done %s94, %s225
    %s227 = sadd.s32 %s12, 14
    %s228 = sld [smem:[#allocation4 + %s227]]
    %s229 = sshrl.u32 %s228, 3
    %s230 = sand.u32 %s228, 7
    %s231 = smul.u32 %s229, 16
    %s232 = sadd.s32 %s230, %s231
    %s233 = smul.addr %s232, 16
    %s234 = scalar_lea.hbm %s1, %s233
    %s235 = scalar_lea.vmem [#allocation5], 22
    %s237 = sshll.u32 %s235, 4
    %s238 = int_to_ptr.vmem [resolvable:$true] %s237
    %240 = dma.hbm_to_vmem [thread:$0]  %s234, 32, %s238, %s109, 128, 128, 1
    %s241 = sshll.u32 %s144, 4
    %242 = dma.done %s109, %s241
    %s243 = sadd.s32 %s12, 15
    %s244 = sld [smem:[#allocation4 + %s243]]
    %s245 = sshrl.u32 %s244, 3
    %s246 = sand.u32 %s244, 7
    %s247 = smul.u32 %s245, 16
    %s248 = sadd.s32 %s246, %s247
    %s249 = smul.addr %s248, 16
    %s250 = scalar_lea.hbm %s1, %s249
    %s251 = scalar_lea.vmem [#allocation5], 23
    %s253 = sshll.u32 %s251, 4
    %s254 = int_to_ptr.vmem [resolvable:$true] %s253
    %256 = dma.hbm_to_vmem [thread:$0]  %s250, 32, %s254, %s124, 128, 128, 1
    %s257 = sshll.u32 %s144, 4
    %258 = dma.done %s124, %s257
    %s259 = sshll.u32 %s144, 4
    %260 = dma.done [#allocation2], %s259
    %s261 = sshll.u32 %s144, 4
    %262 = dma.done %s34, %s261
    %s263 = sshll.u32 %s144, 4
    %264 = dma.done %s49, %s263
    %s265 = sshll.u32 %s144, 4
    %266 = dma.done %s64, %s265
    %s267 = sshll.u32 %s144, 4
    %268 = dma.done %s79, %s267
    %s269 = sshll.u32 %s144, 4
    %270 = dma.done %s94, %s269
    %s271 = sshll.u32 %s144, 4
    %272 = dma.done %s109, %s271
    %s273 = sshll.u32 %s144, 4
    %274 = dma.done %s124, %s273
    // Predicated region
    $region2: #{tpu_custom_call.1} parent=1 // pred_check
      _
    $region3: #{tpu_custom_call.1} parent=1 // pred_check_branch
      %276 = sbr.rel (0) target = $region5
    $region4: #{tpu_custom_call.1} parent=1 // pred_region
      %s278 = ssub.s32 512, 512
      %279 = vsyncadd [#allocation6], %s278
      %s280 = sshll.u32 [#allocation5], 4
      %s281 = int_to_ptr.vmem [resolvable:$true] %s280
      %286 = dma.vmem_to_hbm [thread:$0]  %s281, 512, %s2, [#allocation6], 256, 256, 16
    $region5: #{tpu_custom_call.1} parent=1 // pred_fallthru
      _
    // Predicated region
    $region6: #{tpu_custom_call.1} parent=1 // pred_check
      _
    $region7: #{tpu_custom_call.1} parent=1 // pred_check_branch
      %288 = sbr.rel (0) target = $region9
    $region8: #{tpu_custom_call.1} parent=1 // pred_region
      %289 = dma.done [#allocation6], 512
    $region9: #{tpu_custom_call.1} parent=1 // pred_fallthru
      _
    %290 = vsyncpa [#allocation6], 1
  %291 = vsyncmov [#allocation2]
  %s292 = vpop.sfrf %291
  %p293 = scmp.eq.s32.totalorder %s292, 0
  %p294 = pneg %p293
  %296 = shalt.err (%p294)
  %s297 = scalar_lea.sflag [#allocation2], 1
  %298 = vsyncmov %s297
  %s299 = vpop.sfrf %298
  %p300 = scmp.eq.s32.totalorder %s299, 0
  %p301 = pneg %p300
  %303 = shalt.err (%p301)
  %s304 = scalar_lea.sflag [#allocation2], 2
  %305 = vsyncmov %s304
  %s306 = vpop.sfrf %305
  %p307 = scmp.eq.s32.totalorder %s306, 0
  %p308 = pneg %p307
  %310 = shalt.err (%p308)
  %s311 = scalar_lea.sflag [#allocation2], 3
  %312 = vsyncmov %s311
  %s313 = vpop.sfrf %312
  %p314 = scmp.eq.s32.totalorder %s313, 0
  %p315 = pneg %p314
  %317 = shalt.err (%p315)
  %s318 = scalar_lea.sflag [#allocation2], 4
  %319 = vsyncmov %s318
  %s320 = vpop.sfrf %319
  %p321 = scmp.eq.s32.totalorder %s320, 0
  %p322 = pneg %p321
  %324 = shalt.err (%p322)
  %s325 = scalar_lea.sflag [#allocation2], 5
  %326 = vsyncmov %s325
  %s327 = vpop.sfrf %326
  %p328 = scmp.eq.s32.totalorder %s327, 0
  %p329 = pneg %p328
  %331 = shalt.err (%p329)
  %s332 = scalar_lea.sflag [#allocation2], 6
  %333 = vsyncmov %s332
  %s334 = vpop.sfrf %333
  %p335 = scmp.eq.s32.totalorder %s334, 0
  %p336 = pneg %p335
  %338 = shalt.err (%p336)
  %s339 = scalar_lea.sflag [#allocation2], 7
  %340 = vsyncmov %s339
  %s341 = vpop.sfrf %340
  %p342 = scmp.eq.s32.totalorder %s341, 0
  %p343 = pneg %p342
  %345 = shalt.err (%p343)

</llo_original>
